<compile_context>
chip_gen: v6e
topology: v6e:2x2x1
jax: 0.10.0
libtpu: 0.0.40
codegen_flags: <defaults>
</compile_context>

<pallas_src>
import functools

import jax
import jax.numpy as jnp
from jax import lax
from jax.experimental import pallas as pl
from jax.experimental.pallas import tpu as pltpu

LANES = 128
TARGET_BLOCK_BYTES = 2 * 1024 * 1024   # ~2 MiB per input block per grid step


def _charbonnier_kernel(a_ref, b_ref, out_ref, *, eps2, block_rows,
                        last_block, rem):
    i = pl.program_id(0)

    # Zero the small resident accumulator on the first grid step.
    @pl.when(i == 0)
    def _():
        out_ref[...] = jnp.zeros_like(out_ref)

    # Inputs are DMA'd in their native dtype; upcast in-kernel (no-op for f32).
    a = a_ref[...].astype(jnp.float32)
    b = b_ref[...].astype(jnp.float32)
    d = a - b
    d2 = d * d + eps2
    if eps2 > 0.0:
        # sqrt(d2) == d2 * rsqrt(d2); single EUP op + one VALU mul (d2 > 0).
        val = d2 * lax.rsqrt(d2)
    else:
        val = jnp.sqrt(d2)

    def _reduce(v):
        # (block_rows, 128) -> (block_rows//8, 8, 128) keeps (8,128) tiles
        # intact; the axis-0 sum is a chain of plain vreg adds (no XLU).
        return v.reshape(block_rows // 8, 8, LANES).sum(axis=0)

    if rem == block_rows * LANES:
        # Every block (including the last) is completely full of valid data:
        # no masking anywhere.
        out_ref[...] += _reduce(val)
    else:
        # Only the last block can contain padded / out-of-range elements.
        @pl.when(i != last_block)
        def _():
            out_ref[...] += _reduce(val)

        @pl.when(i == last_block)
        def _():
            row_ids = lax.broadcasted_iota(jnp.int32, (block_rows, LANES), 0)
            lane_ids = lax.broadcasted_iota(jnp.int32, (block_rows, LANES), 1)
            local_idx = row_ids * LANES + lane_ids
            out_ref[...] += _reduce(jnp.where(local_idx < rem, val, 0.0))


def charbonnier_loss(img1, img2, epsilon=1e-3, size_average=True):
    assert img1.shape == img2.shape
    out_dtype = jnp.promote_types(img1.dtype, img2.dtype)
    if img1.dtype != img2.dtype:
        img1 = img1.astype(out_dtype)
        img2 = img2.astype(out_dtype)

    a = img1.reshape(-1)
    b = img2.reshape(-1)
    n = a.shape[0]

    # Pad the flat size to a multiple of 8*128 so it reshapes to (rows, 128)
    # with rows a multiple of 8.  At most 1023 extra elements; padded and
    # Pallas-boundary elements are masked inside the kernel (last block only).
    chunk = 8 * LANES
    n_pad = pl.cdiv(n, chunk) * chunk
    if n_pad != n:
        a = jnp.pad(a, (0, n_pad - n))
        b = jnp.pad(b, (0, n_pad - n))
    rows = n_pad // LANES

    itemsize = jnp.dtype(a.dtype).itemsize
    max_rows = max(8, (TARGET_BLOCK_BYTES // (LANES * itemsize)) // 8 * 8)
    block_rows = min(max_rows, rows)
    total_blocks = pl.cdiv(rows, block_rows)
    last_block = total_blocks - 1
    # Valid (original) elements in the last block; everything past it (wrapper
    # lane pad + Pallas boundary rows) is masked.  Always 0 < rem <= block sz.
    rem = n - last_block * block_rows * LANES

    block_bytes = block_rows * LANES * itemsize
    # 2 inputs x 2 pipeline buffers x block + accumulator + slack.
    vmem_limit = min(max(4 * block_bytes + (4 << 20), 16 << 20), 64 << 20)

    kernel = functools.partial(
        _charbonnier_kernel,
        eps2=float(epsilon) ** 2,
        block_rows=block_rows,
        last_block=last_block,
        rem=rem,
    )

    partial = pl.pallas_call(
        kernel,
        out_shape=jax.ShapeDtypeStruct((8, LANES), jnp.float32),
        grid=(total_blocks,),
        in_specs=[
            pl.BlockSpec((block_rows, LANES), lambda i: (i, 0)),
            pl.BlockSpec((block_rows, LANES), lambda i: (i, 0)),
        ],
        out_specs=pl.BlockSpec((8, LANES), lambda i: (0, 0)),
        compiler_params=pltpu.CompilerParams(
            dimension_semantics=("arbitrary",),
            vmem_limit_bytes=int(vmem_limit),
        ),
    )(a.reshape(rows, LANES), b.reshape(rows, LANES))

    total = jnp.sum(partial, dtype=jnp.float32)
    result = total / jnp.float32(n) if size_average else total
    # Match PyTorch: loss is returned in the (promoted) input dtype.
    return result.astype(out_dtype)


def _reference(img1, img2, epsilon=1e-3, size_average=True):
    diff = img1.astype(jnp.float32) - img2.astype(jnp.float32)
    loss = jnp.sqrt(diff * diff + jnp.float32(epsilon) ** 2)
    return jnp.mean(loss) if size_average else jnp.sum(loss)


if __name__ == "__main__":
    key = jax.random.PRNGKey(0)

    # Primary shape: NCHW images, as in the PyTorch module.
    k1, k2 = jax.random.split(key)
    img1 = jax.random.normal(k1, (2, 4, 16, 16), dtype=jnp.float32)
    img2 = jax.random.normal(k2, (2, 4, 16, 16), dtype=jnp.float32)

    loss_mean = charbonnier_loss(img1, img2, epsilon=1e-3, size_average=True)
    loss_sum = charbonnier_loss(img1, img2, epsilon=1e-3, size_average=False)
    jax.block_until_ready((loss_mean, loss_sum))

    assert jnp.allclose(loss_mean, _reference(img1, img2, 1e-3, True),
                        rtol=1e-5, atol=1e-6), loss_mean
    assert jnp.allclose(loss_sum, _reference(img1, img2, 1e-3, False),
                        rtol=1e-5, atol=1e-3), loss_sum

    # Odd size: exercises the in-kernel ragged-tail mask (n % 1024 != 0).
    k3, k4 = jax.random.split(k1)
    o1 = jax.random.normal(k3, (1, 3, 17, 19), dtype=jnp.float32)
    o2 = jax.random.normal(k4, (1, 3, 17, 19), dtype=jnp.float32)
    lo = charbonnier_loss(o1, o2, epsilon=1e-3, size_average=True)
    jax.block_until_ready(lo)
    assert jnp.allclose(lo, _reference(o1, o2, 1e-3, True),
                        rtol=1e-5, atol=1e-6), lo

    # Multi-block path: >1 grid step with a partial (masked) last block.
    k5, k6 = jax.random.split(k2)
    m1 = jax.random.normal(k5, (2, 8, 160, 256), dtype=jnp.float32)
    m2 = jax.random.normal(k6, (2, 8, 160, 256), dtype=jnp.float32)
    lm = charbonnier_loss(m1, m2, epsilon=1e-3, size_average=True)
    ls = charbonnier_loss(m1, m2, epsilon=1e-3, size_average=False)
    jax.block_until_ready((lm, ls))
    assert jnp.allclose(lm, _reference(m1, m2, 1e-3, True),
                        rtol=1e-5, atol=1e-6), lm
    assert jnp.allclose(ls, _reference(m1, m2, 1e-3, False),
                        rtol=1e-4, atol=1e-2), ls

    # bf16 inputs: exercises native-dtype DMA + in-kernel upcast.
    k7, k8 = jax.random.split(k3)
    b1 = jax.random.normal(k7, (2, 4, 32, 32), dtype=jnp.bfloat16)
    b2 = jax.random.normal(k8, (2, 4, 32, 32), dtype=jnp.bfloat16)
    lb = charbonnier_loss(b1, b2, epsilon=1e-3, size_average=True)
    jax.block_until_ready(lb)
    assert jnp.allclose(jnp.float32(lb), _reference(b1, b2, 1e-3, True),
                        rtol=1e-2, atol=1e-3), lb

    print("KERNEL_OK")
</pallas_src>

<mosaic_0001>
module attributes {stable_mosaic.version = 11 : i64} {
  func.func @_charbonnier_kernel(%arg0: i32, %arg1: memref<16x128xf32, #tpu.memory_space<vmem>>, %arg2: memref<16x128xf32, #tpu.memory_space<vmem>>, %arg3: memref<8x128xf32, #tpu.memory_space<vmem>>) attributes {dimension_semantics = [#tpu.dimension_semantics<arbitrary>], iteration_bounds = array<i64: 1>, scalar_prefetch = 0 : i64, scratch_operands = 0 : i64, tpu.core_type = #tpu.core_type<tc>, window_params = [{transform_indices = @transform_0, window_bounds = array<i64: 16, 128>}, {transform_indices = @transform_1, window_bounds = array<i64: 16, 128>}, {pipeline_mode = #tpu.pipeline_mode<synchronous>, transform_indices = @transform_2, window_bounds = array<i64: 8, 128>}]} {
    %c0_i32 = arith.constant 0 : i32
    %0 = arith.cmpi eq, %arg0, %c0_i32 : i32
    %1 = arith.extui %0 : i1 to i32
    %c0_i32_0 = arith.constant 0 : i32
    %2 = arith.cmpi ne, %1, %c0_i32_0 : i32
    scf.if %2 {
      %cst_9 = arith.constant 0.000000e+00 : f32
      %16 = vector.broadcast %cst_9 : f32 to vector<8x128xf32>
      %c0_10 = arith.constant 0 : index
      %c0_11 = arith.constant 0 : index
      %17 = vector.load %arg3[%c0_10, %c0_11] : memref<8x128xf32, #tpu.memory_space<vmem>>, vector<8x128xf32>
      tpu.vector_store %arg3[%c0_10, %c0_11], %16 {strides = array<i32>} : memref<8x128xf32, #tpu.memory_space<vmem>>, vector<8x128xf32>,
    } else {
    }
    %c0 = arith.constant 0 : index
    %c0_1 = arith.constant 0 : index
    %3 = vector.load %arg1[%c0, %c0_1] : memref<16x128xf32, #tpu.memory_space<vmem>>, vector<16x128xf32>
    %c0_2 = arith.constant 0 : index
    %c0_3 = arith.constant 0 : index
    %4 = vector.load %arg2[%c0_2, %c0_3] : memref<16x128xf32, #tpu.memory_space<vmem>>, vector<16x128xf32>
    %5 = arith.subf %3, %4 : vector<16x128xf32>
    %6 = arith.mulf %5, %5 : vector<16x128xf32>
    %cst = arith.constant 9.99999997E-7 : f32
    %7 = vector.broadcast %cst : f32 to vector<16x128xf32>
    %8 = arith.addf %6, %7 : vector<16x128xf32>
    %9 = math.rsqrt %8 : vector<16x128xf32>
    %10 = arith.mulf %8, %9 : vector<16x128xf32>
    %c0_4 = arith.constant 0 : index
    %c0_5 = arith.constant 0 : index
    %11 = vector.load %arg3[%c0_4, %c0_5] : memref<8x128xf32, #tpu.memory_space<vmem>>, vector<8x128xf32>
    %12 = vector.shape_cast %10 : vector<16x128xf32> to vector<2x8x128xf32>
    %cst_6 = arith.constant dense<0.000000e+00> : vector<8x128xf32>
    %13 = vector.multi_reduction <add>, %12, %cst_6 [0] : vector<2x8x128xf32> to vector<8x128xf32>
    %14 = arith.addf %11, %13 : vector<8x128xf32>
    %c0_7 = arith.constant 0 : index
    %c0_8 = arith.constant 0 : index
    %15 = vector.load %arg3[%c0_7, %c0_8] : memref<8x128xf32, #tpu.memory_space<vmem>>, vector<8x128xf32>
    tpu.vector_store %arg3[%c0_7, %c0_8], %14 {strides = array<i32>} : memref<8x128xf32, #tpu.memory_space<vmem>>, vector<8x128xf32>,
    return
  }
  func.func @transform_0(%arg0: i32) -> (i32, i32) {
    %c0_i32 = arith.constant 0 : i32
    %c0_i32_0 = arith.constant 0 : i32
    return %arg0, %c0_i32 : i32, i32
  }
  func.func @transform_1(%arg0: i32) -> (i32, i32) {
    %c0_i32 = arith.constant 0 : i32
    %c0_i32_0 = arith.constant 0 : i32
    return %arg0, %c0_i32 : i32, i32
  }
  func.func @transform_2(%arg0: i32) -> (i32, i32) {
    %c0_i32 = arith.constant 0 : i32
    %c0_i32_0 = arith.constant 0 : i32
    %c0_i32_1 = arith.constant 0 : i32
    return %c0_i32, %c0_i32_0 : i32, i32
  }
}

</mosaic_0001>

<llo_original>
// kernel: tpu_custom_call.1
$region0: #{tpu_custom_call.1}
  #allocation0 [shape = 'u32[]', space=smem, size = 0x4, offset = 0x4, fixed_abs, tag = 'smem constant byte address 0x4 - core index']
  #allocation1 [shape = 'u32[144,128]{1,0:T(1,128)}', space=vmem, size = 0x12000, scoped, tag = 'internal scratch']
  %s0 = inlined_call_operand.hbm [shape: f32[16,128], index: 0, kind: input, shape index: {}]
  %s1 = inlined_call_operand.hbm [shape: f32[16,128], index: 1, kind: input, shape index: {}]
  %s2 = inlined_call_operand.hbm [shape: f32[8,128], index: 2, kind: output, shape index: {}]
  %s3 = sld [smem:[#allocation0]]
  $region30: #{tpu_custom_call.1} parent=0
    _
  %s5 = ssub.s32 1, %s3
  %s6 = scalar_select 0, %s5, %s3
  $region1: #{tpu_custom_call.1} parent=0
    #allocation2 [shape = 'u8[8192]{0}', space=vmem, size = 0x2000, scoped, tag = 'input window, operand 0, single buffered']
    #allocation3 [shape = 's32[1]{0}', space=sflag, size = 0x4, scoped, tag = 'scoped memory for tpu_custom_call.1']
    #allocation4 [shape = 's32[1]{0}', space=sflag, size = 0x4, scoped, tag = 'scoped memory for tpu_custom_call.1']
    #allocation5 [shape = 'u8[8192]{0}', space=vmem, size = 0x2000, scoped, tag = 'input window, operand 1, single buffered']
    #allocation6 [shape = 's32[1]{0}', space=sflag, size = 0x4, scoped, tag = 'scoped memory for tpu_custom_call.1']
    #allocation7 [shape = 'u8[4096]{0}', space=vmem, size = 0x1000, scoped, tag = 'output window, operand 0, single buffered']
    %7 = vsyncpa [#allocation3], 0
    %8 = vsyncpa [#allocation6], 0
    %9 = vsyncpa [#allocation4], 0
    // Predicated region
    $region2: #{tpu_custom_call.1} parent=1 // pred_check
      _
    $region3: #{tpu_custom_call.1} parent=1 // pred_check_branch
      %11 = sbr.rel (0) target = $region5
    $region4: #{tpu_custom_call.1} parent=1 // pred_region
      %s13 = ssub.s32 256, 256
      %14 = vsyncadd [#allocation3], %s13
      %s15 = sshll.u32 [#allocation2], 4
      %s16 = int_to_ptr.vmem [resolvable:$true] %s15
      %21 = dma.hbm_to_vmem [thread:$0]  %s0, 256, %s16, [#allocation3], 128, 128, 8
    $region5: #{tpu_custom_call.1} parent=1 // pred_fallthru
      _
    // Predicated region
    $region6: #{tpu_custom_call.1} parent=1 // pred_check
      _
    $region7: #{tpu_custom_call.1} parent=1 // pred_check_branch
      %23 = sbr.rel (0) target = $region9
    $region8: #{tpu_custom_call.1} parent=1 // pred_region
      %s25 = ssub.s32 256, 256
      %26 = vsyncadd [#allocation6], %s25
      %s27 = sshll.u32 [#allocation5], 4
      %s28 = int_to_ptr.vmem [resolvable:$true] %s27
      %33 = dma.hbm_to_vmem [thread:$0]  %s1, 256, %s28, [#allocation6], 128, 128, 8
    $region9: #{tpu_custom_call.1} parent=1 // pred_fallthru
      _
    // Predicated region
    $region10: #{tpu_custom_call.1} parent=1 // pred_check
      _
    $region11: #{tpu_custom_call.1} parent=1 // pred_check_branch
      %35 = sbr.rel (0) target = $region13
    $region12: #{tpu_custom_call.1} parent=1 // pred_region
      %36 = dma.done [#allocation3], 256
    $region13: #{tpu_custom_call.1} parent=1 // pred_fallthru
      _
    // Predicated region
    $region14: #{tpu_custom_call.1} parent=1 // pred_check
      _
    $region15: #{tpu_custom_call.1} parent=1 // pred_check_branch
      %38 = sbr.rel (0) target = $region17
    $region16: #{tpu_custom_call.1} parent=1 // pred_region
      %39 = dma.done [#allocation6], 256
    $region17: #{tpu_custom_call.1} parent=1 // pred_fallthru
      _
    %p40 = scmp.eq.s32.totalorder 0, 0
    // Predicated region
    $region18: #{tpu_custom_call.1} parent=1 // pred_check
      %p41 = pneg %p40
    $region19: #{tpu_custom_call.1} parent=1 // pred_check_branch
      %43 = sbr.rel (%p41) target = $region21
    $region20: #{tpu_custom_call.1} parent=1 // pred_region
      %44 = vst [vmem:[#allocation7] sm:$0xff] 0.0
    $region21: #{tpu_custom_call.1} parent=1 // pred_fallthru
      _
    %v45 = vld [vmem:[#allocation2] sm:$0xff]
    %v46 = vld [vmem:[#allocation2 + $0x8] sm:$0xff]
    %v47 = vld [vmem:[#allocation5] sm:$0xff]
    %v48 = vld [vmem:[#allocation5 + $0x8] sm:$0xff]
    %v49 = vsub.f32 %v45, %v47
    %v50 = vsub.f32 %v46, %v48
    %v51 = vmul.f32 %v49, %v49
    %v52 = vmul.f32 %v50, %v50
    %v53 = vadd.f32 %v51, 1e-06
    %v54 = vadd.f32 %v52, 1e-06
    %v55 = vrsqrt.pop %v53
    %v56 = vrsqrt.pop %v54
    %v57 = vmul.f32 %v53, %v55
    %v58 = vmul.f32 %v54, %v56
    %v59 = vld [vmem:[#allocation7] sm:$0xff]
    %v60 = vadd.f32 %v57, %v58
    %v61 = vadd.f32 %v59, %v60
    %62 = vst [vmem:[#allocation7] sm:$0xff] %v61
    // Predicated region
    $region22: #{tpu_custom_call.1} parent=1 // pred_check
      _
    $region23: #{tpu_custom_call.1} parent=1 // pred_check_branch
      %64 = sbr.rel (0) target = $region25
    $region24: #{tpu_custom_call.1} parent=1 // pred_region
      %s66 = ssub.s32 128, 128
      %67 = vsyncadd [#allocation4], %s66
      %s69 = sshll.u32 [#allocation7], 4
      %s70 = int_to_ptr.vmem [resolvable:$true] %s69
      %72 = dma.vmem_to_hbm [thread:$0]  %s70, 128, %s2, [#allocation4]
    $region25: #{tpu_custom_call.1} parent=1 // pred_fallthru
      _
    // Predicated region
    $region26: #{tpu_custom_call.1} parent=1 // pred_check
      _
    $region27: #{tpu_custom_call.1} parent=1 // pred_check_branch
      %74 = sbr.rel (0) target = $region29
    $region28: #{tpu_custom_call.1} parent=1 // pred_region
      %75 = dma.done [#allocation4], 128
    $region29: #{tpu_custom_call.1} parent=1 // pred_fallthru
      _
    %76 = vsyncpa [#allocation3], 1
    %77 = vsyncpa [#allocation6], 1
    %78 = vsyncpa [#allocation4], 1

</llo_original>
